<compile_context>
chip_gen: v5e
topology: v5e:2x2
jax: 0.10.0
libtpu: 0.0.40
codegen_flags: <defaults>
</compile_context>

<pallas_src>
import math
import jax
import jax.numpy as jnp
from jax.experimental import pallas as pl
from jax.experimental.pallas import tpu as pltpu

# fc dims for MyModule18
_DIMS = [(9, 50), (50, 50), (50, 50), (50, 50), (50, 50), (50, 50), (50, 2)]
_FLOPS_PER_ROW = 2 * sum(i * o for i, o in _DIMS)   # 2*13050


def _round_up(n, m):
    return ((n + m - 1) // m) * m


def _mlp_kernel(x_ref,
                w1_ref, b1_ref, w2_ref, b2_ref, w3_ref, b3_ref,
                w4_ref, b4_ref, w5_ref, b5_ref, w6_ref, b6_ref,
                w7_ref, b7_ref,
                o_ref):
    h = x_ref[...]

    # Hoist all bias loads once per grid step (JAX does not CSE broadcast_in_dim).
    b1 = b1_ref[...]; b2 = b2_ref[...]; b3 = b3_ref[...]
    b4 = b4_ref[...]; b5 = b5_ref[...]; b6 = b6_ref[...]
    b7 = b7_ref[...]

    def dense_relu(h, w_ref, b):
        y = jnp.dot(h, w_ref[...], preferred_element_type=jnp.float32) + b
        return jnp.maximum(y, 0.0)

    h = dense_relu(h, w1_ref, b1)     # fc1 + relu
    h = dense_relu(h, w2_ref, b2)     # fc2 + relu
    h = dense_relu(h, w3_ref, b3)     # fc3 + relu
    # dropout1 -> identity (inference / eval semantics)
    h = dense_relu(h, w4_ref, b4)     # fc4 + relu
    # dropout1 -> identity (inference / eval semantics)
    h = dense_relu(h, w5_ref, b5)     # fc5 + relu
    h = dense_relu(h, w6_ref, b6)     # fc6 + relu

    logits = jnp.dot(h, w7_ref[...], preferred_element_type=jnp.float32) + b7  # fc7

    # 2-class softmax specialized as a sigmoid: avoids cross-lane max/sum (XLU) work.
    d = logits[:, 0:1] - logits[:, 1:2]
    p0 = 1.0 / (1.0 + jnp.exp(-d))
    p1 = 1.0 - p0
    o_ref[...] = jnp.concatenate([p0, p1], axis=-1).astype(o_ref.dtype)


def mymodule18_forward(x, params, *, tb=1024):
    """x: [B, 9] float32.  params: list of 7 (w [in,out], b [1,out]) tuples."""
    B, F = x.shape
    assert F == _DIMS[0][0]

    # Batch tile: multiple of 8 sublanes, no larger than the (padded) batch.
    tb = max(8, min(tb, _round_up(B, 8)))
    Bp = _round_up(B, tb)
    if Bp != B:
        x = jnp.pad(x, ((0, Bp - B), (0, 0)))

    flat = []
    for (w, b) in params:
        flat += [w, b]

    # Weights/biases: full-array blocks, constant index map -> resident in VMEM, no re-DMA.
    def resident(a):
        return pl.BlockSpec(a.shape, lambda i: (0,) * a.ndim)

    in_specs = [pl.BlockSpec((tb, F), lambda i: (i, 0))] + [resident(a) for a in flat]

    n_cls = _DIMS[-1][1]
    grid = (pl.cdiv(Bp, tb),)

    cost = pl.CostEstimate(
        flops=_FLOPS_PER_ROW * Bp,
        transcendentals=Bp,                                   # one exp per row
        bytes_accessed=Bp * (F + n_cls) * 4 + sum(a.size for a in flat) * 4,
    )

    out = pl.pallas_call(
        _mlp_kernel,
        out_shape=jax.ShapeDtypeStruct((Bp, n_cls), jnp.float32),
        grid=grid,
        in_specs=in_specs,
        out_specs=pl.BlockSpec((tb, n_cls), lambda i: (i, 0)),
        compiler_params=pltpu.CompilerParams(
            dimension_semantics=("parallel",)),               # megacore-shard the batch axis
        cost_estimate=cost,
    )(x, *flat)
    return out[:B]
    # TODO(synk): for v6e/v7x throughput, optionally pre-cast weights + activations to bf16
    # (keep preferred_element_type=jnp.float32); omitted here to preserve f32 1e-5 accuracy.


def init_params(key):
    """Deterministic init mimicking PyTorch nn.Linear default:
    U(-1/sqrt(fan_in), 1/sqrt(fan_in)) for both weight and bias."""
    params = []
    for (fan_in, fan_out) in _DIMS:
        key, kw, kb = jax.random.split(key, 3)
        bound = 1.0 / math.sqrt(fan_in)
        w = jax.random.uniform(kw, (fan_in, fan_out), jnp.float32, -bound, bound)
        b = jax.random.uniform(kb, (1, fan_out), jnp.float32, -bound, bound)
        params.append((w, b))
    return params


def reference_forward(x, params):
    h = x
    n = len(params)
    for i, (w, b) in enumerate(params):
        h = h @ w + b
        if i < n - 1:
            h = jnp.maximum(h, 0.0)
    return jax.nn.softmax(h, axis=-1)


if __name__ == "__main__":
    key = jax.random.PRNGKey(0)
    k_x, k_x2, k_p = jax.random.split(key, 3)
    params = init_params(k_p)

    # Test 1: small batch, single grid step.
    B = 8
    x = jax.random.normal(k_x, (B, 9), jnp.float32)
    out = jax.block_until_ready(mymodule18_forward(x, params))
    ref = reference_forward(x, params)
    assert out.shape == (B, 2)
    assert jnp.allclose(out, ref, atol=1e-5, rtol=1e-5), "mismatch vs reference (B=8)"
    assert jnp.allclose(jnp.sum(out, axis=-1), jnp.ones((B,)), atol=1e-5)

    # Test 2: batch not a multiple of the tile, multi-step grid (exercises padding + pipeline).
    B2 = 20
    x2 = jax.random.normal(k_x2, (B2, 9), jnp.float32)
    out2 = jax.block_until_ready(mymodule18_forward(x2, params, tb=8))
    ref2 = reference_forward(x2, params)
    assert out2.shape == (B2, 2)
    assert jnp.allclose(out2, ref2, atol=1e-5, rtol=1e-5), "mismatch vs reference (B=20)"
    assert jnp.allclose(jnp.sum(out2, axis=-1), jnp.ones((B2,)), atol=1e-5)

    print("KERNEL_OK")
</pallas_src>

<mosaic_0001>
module attributes {stable_mosaic.version = 11 : i64} {
  func.func @_mlp_kernel(%arg0: i32, %arg1: memref<8x9xf32, #tpu.memory_space<vmem>>, %arg2: memref<9x50xf32, #tpu.memory_space<vmem>>, %arg3: memref<1x50xf32, #tpu.memory_space<vmem>>, %arg4: memref<50x50xf32, #tpu.memory_space<vmem>>, %arg5: memref<1x50xf32, #tpu.memory_space<vmem>>, %arg6: memref<50x50xf32, #tpu.memory_space<vmem>>, %arg7: memref<1x50xf32, #tpu.memory_space<vmem>>, %arg8: memref<50x50xf32, #tpu.memory_space<vmem>>, %arg9: memref<1x50xf32, #tpu.memory_space<vmem>>, %arg10: memref<50x50xf32, #tpu.memory_space<vmem>>, %arg11: memref<1x50xf32, #tpu.memory_space<vmem>>, %arg12: memref<50x50xf32, #tpu.memory_space<vmem>>, %arg13: memref<1x50xf32, #tpu.memory_space<vmem>>, %arg14: memref<50x2xf32, #tpu.memory_space<vmem>>, %arg15: memref<1x2xf32, #tpu.memory_space<vmem>>, %arg16: memref<8x2xf32, #tpu.memory_space<vmem>>) attributes {dimension_semantics = [#tpu.dimension_semantics<parallel>], iteration_bounds = array<i64: 1>, scalar_prefetch = 0 : i64, scratch_operands = 0 : i64, tpu.core_type = #tpu.core_type<tc>, window_params = [{transform_indices = @transform_0, window_bounds = array<i64: 8, 9>}, {pipeline_mode = #tpu.pipeline_mode<synchronous>, transform_indices = @transform_1, window_bounds = array<i64: 9, 50>}, {pipeline_mode = #tpu.pipeline_mode<synchronous>, transform_indices = @transform_2, window_bounds = array<i64: 1, 50>}, {pipeline_mode = #tpu.pipeline_mode<synchronous>, transform_indices = @transform_3, window_bounds = array<i64: 50, 50>}, {pipeline_mode = #tpu.pipeline_mode<synchronous>, transform_indices = @transform_4, window_bounds = array<i64: 1, 50>}, {pipeline_mode = #tpu.pipeline_mode<synchronous>, transform_indices = @transform_5, window_bounds = array<i64: 50, 50>}, {pipeline_mode = #tpu.pipeline_mode<synchronous>, transform_indices = @transform_6, window_bounds = array<i64: 1, 50>}, {pipeline_mode = #tpu.pipeline_mode<synchronous>, transform_indices = @transform_7, window_bounds = array<i64: 50, 50>}, {pipeline_mode = #tpu.pipeline_mode<synchronous>, transform_indices = @transform_8, window_bounds = array<i64: 1, 50>}, {pipeline_mode = #tpu.pipeline_mode<synchronous>, transform_indices = @transform_9, window_bounds = array<i64: 50, 50>}, {pipeline_mode = #tpu.pipeline_mode<synchronous>, transform_indices = @transform_10, window_bounds = array<i64: 1, 50>}, {pipeline_mode = #tpu.pipeline_mode<synchronous>, transform_indices = @transform_11, window_bounds = array<i64: 50, 50>}, {pipeline_mode = #tpu.pipeline_mode<synchronous>, transform_indices = @transform_12, window_bounds = array<i64: 1, 50>}, {pipeline_mode = #tpu.pipeline_mode<synchronous>, transform_indices = @transform_13, window_bounds = array<i64: 50, 2>}, {pipeline_mode = #tpu.pipeline_mode<synchronous>, transform_indices = @transform_14, window_bounds = array<i64: 1, 2>}, {transform_indices = @transform_15, window_bounds = array<i64: 8, 2>}]} {
    %c0 = arith.constant 0 : index
    %c0_0 = arith.constant 0 : index
    %0 = vector.load %arg1[%c0, %c0_0] : memref<8x9xf32, #tpu.memory_space<vmem>>, vector<8x9xf32>
    %c0_1 = arith.constant 0 : index
    %c0_2 = arith.constant 0 : index
    %1 = vector.load %arg3[%c0_1, %c0_2] : memref<1x50xf32, #tpu.memory_space<vmem>>, vector<1x50xf32>
    %c0_3 = arith.constant 0 : index
    %c0_4 = arith.constant 0 : index
    %2 = vector.load %arg5[%c0_3, %c0_4] : memref<1x50xf32, #tpu.memory_space<vmem>>, vector<1x50xf32>
    %c0_5 = arith.constant 0 : index
    %c0_6 = arith.constant 0 : index
    %3 = vector.load %arg7[%c0_5, %c0_6] : memref<1x50xf32, #tpu.memory_space<vmem>>, vector<1x50xf32>
    %c0_7 = arith.constant 0 : index
    %c0_8 = arith.constant 0 : index
    %4 = vector.load %arg9[%c0_7, %c0_8] : memref<1x50xf32, #tpu.memory_space<vmem>>, vector<1x50xf32>
    %c0_9 = arith.constant 0 : index
    %c0_10 = arith.constant 0 : index
    %5 = vector.load %arg11[%c0_9, %c0_10] : memref<1x50xf32, #tpu.memory_space<vmem>>, vector<1x50xf32>
    %c0_11 = arith.constant 0 : index
    %c0_12 = arith.constant 0 : index
    %6 = vector.load %arg13[%c0_11, %c0_12] : memref<1x50xf32, #tpu.memory_space<vmem>>, vector<1x50xf32>
    %c0_13 = arith.constant 0 : index
    %c0_14 = arith.constant 0 : index
    %7 = vector.load %arg15[%c0_13, %c0_14] : memref<1x2xf32, #tpu.memory_space<vmem>>, vector<1x2xf32>
    %c0_15 = arith.constant 0 : index
    %c0_16 = arith.constant 0 : index
    %8 = vector.load %arg2[%c0_15, %c0_16] : memref<9x50xf32, #tpu.memory_space<vmem>>, vector<9x50xf32>
    %cst = arith.constant dense<0.000000e+00> : vector<8x50xf32>
    %9 = tpu.matmul %0, %8, %cst {dimension_numbers = #tpu.dot_dimension_numbers<[1], [0], [0], [1], [0, 0, 1, 1], [], []>} : vector<8x9xf32>, vector<9x50xf32>, vector<8x50xf32> -> vector<8x50xf32>
    %10 = vector.broadcast %1 : vector<1x50xf32> to vector<8x50xf32>
    %11 = arith.addf %9, %10 : vector<8x50xf32>
    %cst_17 = arith.constant 0.000000e+00 : f32
    %12 = vector.broadcast %cst_17 : f32 to vector<8x50xf32>
    %13 = arith.maximumf %11, %12 : vector<8x50xf32>
    %c0_18 = arith.constant 0 : index
    %c0_19 = arith.constant 0 : index
    %14 = vector.load %arg4[%c0_18, %c0_19] : memref<50x50xf32, #tpu.memory_space<vmem>>, vector<50x50xf32>
    %cst_20 = arith.constant dense<0.000000e+00> : vector<8x50xf32>
    %15 = tpu.matmul %13, %14, %cst_20 {dimension_numbers = #tpu.dot_dimension_numbers<[1], [0], [0], [1], [0, 0, 1, 1], [], []>} : vector<8x50xf32>, vector<50x50xf32>, vector<8x50xf32> -> vector<8x50xf32>
    %16 = vector.broadcast %2 : vector<1x50xf32> to vector<8x50xf32>
    %17 = arith.addf %15, %16 : vector<8x50xf32>
    %cst_21 = arith.constant 0.000000e+00 : f32
    %18 = vector.broadcast %cst_21 : f32 to vector<8x50xf32>
    %19 = arith.maximumf %17, %18 : vector<8x50xf32>
    %c0_22 = arith.constant 0 : index
    %c0_23 = arith.constant 0 : index
    %20 = vector.load %arg6[%c0_22, %c0_23] : memref<50x50xf32, #tpu.memory_space<vmem>>, vector<50x50xf32>
    %cst_24 = arith.constant dense<0.000000e+00> : vector<8x50xf32>
    %21 = tpu.matmul %19, %20, %cst_24 {dimension_numbers = #tpu.dot_dimension_numbers<[1], [0], [0], [1], [0, 0, 1, 1], [], []>} : vector<8x50xf32>, vector<50x50xf32>, vector<8x50xf32> -> vector<8x50xf32>
    %22 = vector.broadcast %3 : vector<1x50xf32> to vector<8x50xf32>
    %23 = arith.addf %21, %22 : vector<8x50xf32>
    %cst_25 = arith.constant 0.000000e+00 : f32
    %24 = vector.broadcast %cst_25 : f32 to vector<8x50xf32>
    %25 = arith.maximumf %23, %24 : vector<8x50xf32>
    %c0_26 = arith.constant 0 : index
    %c0_27 = arith.constant 0 : index
    %26 = vector.load %arg8[%c0_26, %c0_27] : memref<50x50xf32, #tpu.memory_space<vmem>>, vector<50x50xf32>
    %cst_28 = arith.constant dense<0.000000e+00> : vector<8x50xf32>
    %27 = tpu.matmul %25, %26, %cst_28 {dimension_numbers = #tpu.dot_dimension_numbers<[1], [0], [0], [1], [0, 0, 1, 1], [], []>} : vector<8x50xf32>, vector<50x50xf32>, vector<8x50xf32> -> vector<8x50xf32>
    %28 = vector.broadcast %4 : vector<1x50xf32> to vector<8x50xf32>
    %29 = arith.addf %27, %28 : vector<8x50xf32>
    %cst_29 = arith.constant 0.000000e+00 : f32
    %30 = vector.broadcast %cst_29 : f32 to vector<8x50xf32>
    %31 = arith.maximumf %29, %30 : vector<8x50xf32>
    %c0_30 = arith.constant 0 : index
    %c0_31 = arith.constant 0 : index
    %32 = vector.load %arg10[%c0_30, %c0_31] : memref<50x50xf32, #tpu.memory_space<vmem>>, vector<50x50xf32>
    %cst_32 = arith.constant dense<0.000000e+00> : vector<8x50xf32>
    %33 = tpu.matmul %31, %32, %cst_32 {dimension_numbers = #tpu.dot_dimension_numbers<[1], [0], [0], [1], [0, 0, 1, 1], [], []>} : vector<8x50xf32>, vector<50x50xf32>, vector<8x50xf32> -> vector<8x50xf32>
    %34 = vector.broadcast %5 : vector<1x50xf32> to vector<8x50xf32>
    %35 = arith.addf %33, %34 : vector<8x50xf32>
    %cst_33 = arith.constant 0.000000e+00 : f32
    %36 = vector.broadcast %cst_33 : f32 to vector<8x50xf32>
    %37 = arith.maximumf %35, %36 : vector<8x50xf32>
    %c0_34 = arith.constant 0 : index
    %c0_35 = arith.constant 0 : index
    %38 = vector.load %arg12[%c0_34, %c0_35] : memref<50x50xf32, #tpu.memory_space<vmem>>, vector<50x50xf32>
    %cst_36 = arith.constant dense<0.000000e+00> : vector<8x50xf32>
    %39 = tpu.matmul %37, %38, %cst_36 {dimension_numbers = #tpu.dot_dimension_numbers<[1], [0], [0], [1], [0, 0, 1, 1], [], []>} : vector<8x50xf32>, vector<50x50xf32>, vector<8x50xf32> -> vector<8x50xf32>
    %40 = vector.broadcast %6 : vector<1x50xf32> to vector<8x50xf32>
    %41 = arith.addf %39, %40 : vector<8x50xf32>
    %cst_37 = arith.constant 0.000000e+00 : f32
    %42 = vector.broadcast %cst_37 : f32 to vector<8x50xf32>
    %43 = arith.maximumf %41, %42 : vector<8x50xf32>
    %c0_38 = arith.constant 0 : index
    %c0_39 = arith.constant 0 : index
    %44 = vector.load %arg14[%c0_38, %c0_39] : memref<50x2xf32, #tpu.memory_space<vmem>>, vector<50x2xf32>
    %cst_40 = arith.constant dense<0.000000e+00> : vector<8x2xf32>
    %45 = tpu.matmul %43, %44, %cst_40 {dimension_numbers = #tpu.dot_dimension_numbers<[1], [0], [0], [1], [0, 0, 1, 1], [], []>} : vector<8x50xf32>, vector<50x2xf32>, vector<8x2xf32> -> vector<8x2xf32>
    %46 = vector.broadcast %7 : vector<1x2xf32> to vector<8x2xf32>
    %47 = arith.addf %45, %46 : vector<8x2xf32>
    %48 = vector.extract_strided_slice %47 {offsets = [0, 0], sizes = [8, 1], strides = [1, 1]} : vector<8x2xf32> to vector<8x1xf32>
    %49 = vector.extract_strided_slice %47 {offsets = [0, 1], sizes = [8, 1], strides = [1, 1]} : vector<8x2xf32> to vector<8x1xf32>
    %50 = arith.subf %48, %49 : vector<8x1xf32>
    %cst_41 = arith.constant 0.000000e+00 : f32
    %51 = vector.broadcast %cst_41 : f32 to vector<8x1xf32>
    %52 = arith.subf %51, %50 : vector<8x1xf32>
    %53 = math.exp %52 : vector<8x1xf32>
    %cst_42 = arith.constant 1.000000e+00 : f32
    %54 = vector.broadcast %cst_42 : f32 to vector<8x1xf32>
    %55 = arith.addf %54, %53 : vector<8x1xf32>
    %cst_43 = arith.constant 1.000000e+00 : f32
    %56 = vector.broadcast %cst_43 : f32 to vector<8x1xf32>
    %57 = arith.divf %56, %55 : vector<8x1xf32>
    %cst_44 = arith.constant 1.000000e+00 : f32
    %58 = vector.broadcast %cst_44 : f32 to vector<8x1xf32>
    %59 = arith.subf %58, %57 : vector<8x1xf32>
    %60 = tpu.concatenate %57, %59 in 1 : vector<8x1xf32>, vector<8x1xf32> -> vector<8x2xf32>
    %c0_45 = arith.constant 0 : index
    %c0_46 = arith.constant 0 : index
    %61 = vector.load %arg16[%c0_45, %c0_46] : memref<8x2xf32, #tpu.memory_space<vmem>>, vector<8x2xf32>
    tpu.vector_store %arg16[%c0_45, %c0_46], %60 {strides = array<i32>} : memref<8x2xf32, #tpu.memory_space<vmem>>, vector<8x2xf32>,
    return
  }
  func.func @transform_0(%arg0: i32) -> (i32, i32) {
    %c0_i32 = arith.constant 0 : i32
    %c0_i32_0 = arith.constant 0 : i32
    return %arg0, %c0_i32 : i32, i32
  }
  func.func @transform_1(%arg0: i32) -> (i32, i32) {
    %c0_i32 = arith.constant 0 : i32
    %c0_i32_0 = arith.constant 0 : i32
    %c0_i32_1 = arith.constant 0 : i32
    return %c0_i32, %c0_i32_0 : i32, i32
  }
  func.func @transform_2(%arg0: i32) -> (i32, i32) {
    %c0_i32 = arith.constant 0 : i32
    %c0_i32_0 = arith.constant 0 : i32
    %c0_i32_1 = arith.constant 0 : i32
    return %c0_i32, %c0_i32_0 : i32, i32
  }
  func.func @transform_3(%arg0: i32) -> (i32, i32) {
    %c0_i32 = arith.constant 0 : i32
    %c0_i32_0 = arith.constant 0 : i32
    %c0_i32_1 = arith.constant 0 : i32
    return %c0_i32, %c0_i32_0 : i32, i32
  }
  func.func @transform_4(%arg0: i32) -> (i32, i32) {
    %c0_i32 = arith.constant 0 : i32
    %c0_i32_0 = arith.constant 0 : i32
    %c0_i32_1 = arith.constant 0 : i32
    return %c0_i32, %c0_i32_0 : i32, i32
  }
  func.func @transform_5(%arg0: i32) -> (i32, i32) {
    %c0_i32 = arith.constant 0 : i32
    %c0_i32_0 = arith.constant 0 : i32
    %c0_i32_1 = arith.constant 0 : i32
    return %c0_i32, %c0_i32_0 : i32, i32
  }
  func.func @transform_6(%arg0: i32) -> (i32, i32) {
    %c0_i32 = arith.constant 0 : i32
    %c0_i32_0 = arith.constant 0 : i32
    %c0_i32_1 = arith.constant 0 : i32
    return %c0_i32, %c0_i32_0 : i32, i32
  }
  func.func @transform_7(%arg0: i32) -> (i32, i32) {
    %c0_i32 = arith.constant 0 : i32
    %c0_i32_0 = arith.constant 0 : i32
    %c0_i32_1 = arith.constant 0 : i32
    return %c0_i32, %c0_i32_0 : i32, i32
  }
  func.func @transform_8(%arg0: i32) -> (i32, i32) {
    %c0_i32 = arith.constant 0 : i32
    %c0_i32_0 = arith.constant 0 : i32
    %c0_i32_1 = arith.constant 0 : i32
    return %c0_i32, %c0_i32_0 : i32, i32
  }
  func.func @transform_9(%arg0: i32) -> (i32, i32) {
    %c0_i32 = arith.constant 0 : i32
    %c0_i32_0 = arith.constant 0 : i32
    %c0_i32_1 = arith.constant 0 : i32
    return %c0_i32, %c0_i32_0 : i32, i32
  }
  func.func @transform_10(%arg0: i32) -> (i32, i32) {
    %c0_i32 = arith.constant 0 : i32
    %c0_i32_0 = arith.constant 0 : i32
    %c0_i32_1 = arith.constant 0 : i32
    return %c0_i32, %c0_i32_0 : i32, i32
  }
  func.func @transform_11(%arg0: i32) -> (i32, i32) {
    %c0_i32 = arith.constant 0 : i32
    %c0_i32_0 = arith.constant 0 : i32
    %c0_i32_1 = arith.constant 0 : i32
    return %c0_i32, %c0_i32_0 : i32, i32
  }
  func.func @transform_12(%arg0: i32) -> (i32, i32) {
    %c0_i32 = arith.constant 0 : i32
    %c0_i32_0 = arith.constant 0 : i32
    %c0_i32_1 = arith.constant 0 : i32
    return %c0_i32, %c0_i32_0 : i32, i32
  }
  func.func @transform_13(%arg0: i32) -> (i32, i32) {
    %c0_i32 = arith.constant 0 : i32
    %c0_i32_0 = arith.constant 0 : i32
    %c0_i32_1 = arith.constant 0 : i32
    return %c0_i32, %c0_i32_0 : i32, i32
  }
  func.func @transform_14(%arg0: i32) -> (i32, i32) {
    %c0_i32 = arith.constant 0 : i32
    %c0_i32_0 = arith.constant 0 : i32
    %c0_i32_1 = arith.constant 0 : i32
    return %c0_i32, %c0_i32_0 : i32, i32
  }
  func.func @transform_15(%arg0: i32) -> (i32, i32) {
    %c0_i32 = arith.constant 0 : i32
    %c0_i32_0 = arith.constant 0 : i32
    return %arg0, %c0_i32 : i32, i32
  }
}

</mosaic_0001>

<llo_original>
// kernel: tpu_custom_call.1
$region0: #{tpu_custom_call.1}
  #allocation0 [shape = 'u32[]', space=smem, size = 0x4, offset = 0x4, fixed_abs, tag = 'smem constant byte address 0x4 - core index']
  #allocation1 [shape = 'u32[72,128]{1,0:T(1,128)}', space=vmem, size = 0x9000, scoped, tag = 'internal scratch']
  %s0 = inlined_call_operand.hbm [shape: f32[8,9], index: 0, kind: input, shape index: {}]
  %s1 = inlined_call_operand.hbm [shape: f32[9,50], index: 1, kind: input, shape index: {}]
  %s2 = inlined_call_operand.vmem [shape: f32[1,50], index: 2, kind: input, shape index: {}]
  %s3 = inlined_call_operand.vmem [shape: f32[50,50], index: 3, kind: input, shape index: {}]
  %s4 = inlined_call_operand.vmem [shape: f32[1,50], index: 4, kind: input, shape index: {}]
  %s5 = inlined_call_operand.hbm [shape: f32[50,50], index: 5, kind: input, shape index: {}]
  %s6 = inlined_call_operand.vmem [shape: f32[1,50], index: 6, kind: input, shape index: {}]
  %s7 = inlined_call_operand.hbm [shape: f32[50,50], index: 7, kind: input, shape index: {}]
  %s8 = inlined_call_operand.vmem [shape: f32[1,50], index: 8, kind: input, shape index: {}]
  %s9 = inlined_call_operand.hbm [shape: f32[50,50], index: 9, kind: input, shape index: {}]
  %s10 = inlined_call_operand.vmem [shape: f32[1,50], index: 10, kind: input, shape index: {}]
  %s11 = inlined_call_operand.hbm [shape: f32[50,50], index: 11, kind: input, shape index: {}]
  %s12 = inlined_call_operand.vmem [shape: f32[1,50], index: 12, kind: input, shape index: {}]
  %s13 = inlined_call_operand.vmem [shape: f32[50,2], index: 13, kind: input, shape index: {}]
  %s14 = inlined_call_operand.vmem [shape: f32[1,2], index: 14, kind: input, shape index: {}]
  %s15 = inlined_call_operand.vmem [shape: f32[8,2], index: 15, kind: output, shape index: {}]
  %s16 = sld [smem:[#allocation0]]
  $region94: #{tpu_custom_call.1} parent=0
    _
  %s18 = ssub.s32 1, %s16
  %s19 = scalar_select 0, %s18, %s16
  $region1: #{tpu_custom_call.1} parent=0
    #allocation2 [shape = 'u8[4096]{0}', space=vmem, size = 0x1000, scoped, tag = 'input window, operand 0, single buffered']
    #allocation3 [shape = 's32[1]{0}', space=sflag, size = 0x4, scoped, tag = 'scoped memory for tpu_custom_call.1']
    #allocation4 [shape = 'u8[8192]{0}', space=vmem, size = 0x2000, scoped, tag = 'input window, operand 1, single buffered']
    #allocation5 [shape = 's32[1]{0}', space=sflag, size = 0x4, scoped, tag = 'scoped memory for tpu_custom_call.1']
    #allocation6 [shape = 'u8[28672]{0}', space=vmem, size = 0x7000, scoped, tag = 'input window, operand 5, single buffered']
    #allocation7 [shape = 'u8[28672]{0}', space=vmem, size = 0x7000, scoped, tag = 'input window, operand 7, single buffered']
    #allocation8 [shape = 's32[1]{0}', space=sflag, size = 0x4, scoped, tag = 'scoped memory for tpu_custom_call.1']
    #allocation9 [shape = 'u8[28672]{0}', space=vmem, size = 0x7000, scoped, tag = 'input window, operand 9, single buffered']
    #allocation10 [shape = 'u8[28672]{0}', space=vmem, size = 0x7000, scoped, tag = 'input window, operand 11, single buffered']
    #allocation11 [shape = 's32[1]{0}', space=sflag, size = 0x4, scoped, tag = 'scoped memory for tpu_custom_call.1']
    %20 = vsyncpa [#allocation3], 0
    %21 = vsyncpa [#allocation5], 0
    %22 = vsyncpa [#allocation8], 0
    %23 = vsyncpa [#allocation11], 0
    // Predicated region
    $region2: #{tpu_custom_call.1} parent=1 // pred_check
      _
    $region3: #{tpu_custom_call.1} parent=1 // pred_check_branch
      %25 = sbr.rel (0) target = $region5
    $region4: #{tpu_custom_call.1} parent=1 // pred_region
      %27 = vsyncadd [#allocation3], 0
      %s29 = sshll.u32 %s0, 4
      %s30 = int_to_ptr.hbm [resolvable:$true] %s29
      %s31 = sshll.u32 [#allocation2], 4
      %s32 = int_to_ptr.vmem [resolvable:$true] %s31
      %34 = dma.hbm_to_vmem [thread:$0]  %s30, 128, %s32, [#allocation3]
    $region5: #{tpu_custom_call.1} parent=1 // pred_fallthru
      _
    // Predicated region
    $region6: #{tpu_custom_call.1} parent=1 // pred_check
      _
    $region7: #{tpu_custom_call.1} parent=1 // pred_check_branch
      %36 = sbr.rel (0) target = $region9
    $region8: #{tpu_custom_call.1} parent=1 // pred_region
      %38 = vsyncadd [#allocation5], 0
      %s39 = sshll.u32 %s1, 4
      %s40 = int_to_ptr.hbm [resolvable:$true] %s39
      %s41 = sshll.u32 [#allocation4], 4
      %s42 = int_to_ptr.vmem [resolvable:$true] %s41
      %47 = dma.hbm_to_vmem [thread:$0]  %s40, 256, %s42, [#allocation5], 128, 128, 8
    $region9: #{tpu_custom_call.1} parent=1 // pred_fallthru
      _
    // Predicated region
    $region10: #{tpu_custom_call.1} parent=1 // pred_check
      _
    $region11: #{tpu_custom_call.1} parent=1 // pred_check_branch
      %49 = sbr.rel (0) target = $region13
    $region12: #{tpu_custom_call.1} parent=1 // pred_region
      _
    $region13: #{tpu_custom_call.1} parent=1 // pred_fallthru
      _
    // Predicated region
    $region14: #{tpu_custom_call.1} parent=1 // pred_check
      _
    $region15: #{tpu_custom_call.1} parent=1 // pred_check_branch
      %51 = sbr.rel (0) target = $region17
    $region16: #{tpu_custom_call.1} parent=1 // pred_region
      _
    $region17: #{tpu_custom_call.1} parent=1 // pred_fallthru
      _
    // Predicated region
    $region18: #{tpu_custom_call.1} parent=1 // pred_check
      _
    $region19: #{tpu_custom_call.1} parent=1 // pred_check_branch
      %53 = sbr.rel (0) target = $region21
    $region20: #{tpu_custom_call.1} parent=1 // pred_region
      _
    $region21: #{tpu_custom_call.1} parent=1 // pred_fallthru
      _
    // Predicated region
    $region22: #{tpu_custom_call.1} parent=1 // pred_check
      _
    $region23: #{tpu_custom_call.1} parent=1 // pred_check_branch
      %55 = sbr.rel (0) target = $region25
    $region24: #{tpu_custom_call.1} parent=1 // pred_region
      %57 = vsyncadd [#allocation5], 0
      %s58 = sshll.u32 %s5, 4
      %s59 = int_to_ptr.hbm [resolvable:$true] %s58
      %s60 = sshll.u32 [#allocation6], 4
      %s61 = int_to_ptr.vmem [resolvable:$true] %s60
      %66 = dma.hbm_to_vmem [thread:$0]  %s59, 896, %s61, [#allocation5], 128, 128, 8
    $region25: #{tpu_custom_call.1} parent=1 // pred_fallthru
      _
    // Predicated region
    $region26: #{tpu_custom_call.1} parent=1 // pred_check
      _
    $region27: #{tpu_custom_call.1} parent=1 // pred_check_branch
      %68 = sbr.rel (0) target = $region29
    $region28: #{tpu_custom_call.1} parent=1 // pred_region
      _
    $region29: #{tpu_custom_call.1} parent=1 // pred_fallthru
      _
    // Predicated region
    $region30: #{tpu_custom_call.1} parent=1 // pred_check
      _
    $region31: #{tpu_custom_call.1} parent=1 // pred_check_branch
      %70 = sbr.rel (0) target = $region33
    $region32: #{tpu_custom_call.1} parent=1 // pred_region
      %72 = vsyncadd [#allocation8], 0
      %s73 = sshll.u32 %s7, 4
      %s74 = int_to_ptr.hbm [resolvable:$true] %s73
      %s75 = sshll.u32 [#allocation7], 4
      %s76 = int_to_ptr.vmem [resolvable:$true] %s75
      %81 = dma.hbm_to_vmem [thread:$0]  %s74, 896, %s76, [#allocation8], 128, 128, 8
    $region33: #{tpu_custom_call.1} parent=1 // pred_fallthru
      _
    // Predicated region
    $region34: #{tpu_custom_call.1} parent=1 // pred_check
      _
    $region35: #{tpu_custom_call.1} parent=1 // pred_check_branch
      %83 = sbr.rel (0) target = $region37
    $region36: #{tpu_custom_call.1} parent=1 // pred_region
      _
    $region37: #{tpu_custom_call.1} parent=1 // pred_fallthru
      _
    // Predicated region
    $region38: #{tpu_custom_call.1} parent=1 // pred_check
      _
    $region39: #{tpu_custom_call.1} parent=1 // pred_check_branch
      %85 = sbr.rel (0) target = $region41
    $region40: #{tpu_custom_call.1} parent=1 // pred_region
      %87 = vsyncadd [#allocation8], 0
      %s88 = sshll.u32 %s9, 4
      %s89 = int_to_ptr.hbm [resolvable:$true] %s88
      %s90 = sshll.u32 [#allocation9], 4
      %s91 = int_to_ptr.vmem [resolvable:$true] %s90
      %96 = dma.hbm_to_vmem [thread:$0]  %s89, 896, %s91, [#allocation8], 128, 128, 8
    $region41: #{tpu_custom_call.1} parent=1 // pred_fallthru
      _
    // Predicated region
    $region42: #{tpu_custom_call.1} parent=1 // pred_check
      _
    $region43: #{tpu_custom_call.1} parent=1 // pred_check_branch
      %98 = sbr.rel (0) target = $region45
    $region44: #{tpu_custom_call.1} parent=1 // pred_region
      _
    $region45: #{tpu_custom_call.1} parent=1 // pred_fallthru
      _
    // Predicated region
    $region46: #{tpu_custom_call.1} parent=1 // pred_check
      _
    $region47: #{tpu_custom_call.1} parent=1 // pred_check_branch
      %100 = sbr.rel (0) target = $region49
    $region48: #{tpu_custom_call.1} parent=1 // pred_region
      %102 = vsyncadd [#allocation11], 0
      %s103 = sshll.u32 %s11, 4
      %s104 = int_to_ptr.hbm [resolvable:$true] %s103
      %s105 = sshll.u32 [#allocation10], 4
      %s106 = int_to_ptr.vmem [resolvable:$true] %s105
      %111 = dma.hbm_to_vmem [thread:$0]  %s104, 896, %s106, [#allocation11], 128, 128, 8
    $region49: #{tpu_custom_call.1} parent=1 // pred_fallthru
      _
    // Predicated region
    $region50: #{tpu_custom_call.1} parent=1 // pred_check
      _
    $region51: #{tpu_custom_call.1} parent=1 // pred_check_branch
      %113 = sbr.rel (0) target = $region53
    $region52: #{tpu_custom_call.1} parent=1 // pred_region
      _
    $region53: #{tpu_custom_call.1} parent=1 // pred_fallthru
      _
    // Predicated region
    $region54: #{tpu_custom_call.1} parent=1 // pred_check
      _
    $region55: #{tpu_custom_call.1} parent=1 // pred_check_branch
      %115 = sbr.rel (0) target = $region57
    $region56: #{tpu_custom_call.1} parent=1 // pred_region
      _
    $region57: #{tpu_custom_call.1} parent=1 // pred_fallthru
      _
    // Predicated region
    $region58: #{tpu_custom_call.1} parent=1 // pred_check
      _
    $region59: #{tpu_custom_call.1} parent=1 // pred_check_branch
      %117 = sbr.rel (0) target = $region61
    $region60: #{tpu_custom_call.1} parent=1 // pred_region
      _
    $region61: #{tpu_custom_call.1} parent=1 // pred_fallthru
      _
    // Predicated region
    $region62: #{tpu_custom_call.1} parent=1 // pred_check
      _
    $region63: #{tpu_custom_call.1} parent=1 // pred_check_branch
      %119 = sbr.rel (0) target = $region65
    $region64: #{tpu_custom_call.1} parent=1 // pred_region
      %121 = dma.done [#allocation3], 128
    $region65: #{tpu_custom_call.1} parent=1 // pred_fallthru
      _
    // Predicated region
    $region66: #{tpu_custom_call.1} parent=1 // pred_check
      _
    $region67: #{tpu_custom_call.1} parent=1 // pred_check_branch
      %123 = sbr.rel (0) target = $region69
    $region68: #{tpu_custom_call.1} parent=1 // pred_region
      %125 = dma.done [#allocation5], 256
    $region69: #{tpu_custom_call.1} parent=1 // pred_fallthru
      _
    // Predicated region
    $region70: #{tpu_custom_call.1} parent=1 // pred_check
      _
    $region71: #{tpu_custom_call.1} parent=1 // pred_check_branch
      %127 = sbr.rel (0) target = $region73
    $region72: #{tpu_custom_call.1} parent=1 // pred_region
      %129 = dma.done [#allocation5], 896
    $region73: #{tpu_custom_call.1} parent=1 // pred_fallthru
      _
    // Predicated region
    $region74: #{tpu_custom_call.1} parent=1 // pred_check
      _
    $region75: #{tpu_custom_call.1} parent=1 // pred_check_branch
      %131 = sbr.rel (0) target = $region77
    $region76: #{tpu_custom_call.1} parent=1 // pred_region
      %133 = dma.done [#allocation8], 896
    $region77: #{tpu_custom_call.1} parent=1 // pred_fallthru
      _
    // Predicated region
    $region78: #{tpu_custom_call.1} parent=1 // pred_check
      _
    $region79: #{tpu_custom_call.1} parent=1 // pred_check_branch
      %135 = sbr.rel (0) target = $region81
    $region80: #{tpu_custom_call.1} parent=1 // pred_region
      %137 = dma.done [#allocation8], 896
    $region81: #{tpu_custom_call.1} parent=1 // pred_fallthru
      _
    // Predicated region
    $region82: #{tpu_custom_call.1} parent=1 // pred_check
      _
    $region83: #{tpu_custom_call.1} parent=1 // pred_check_branch
      %139 = sbr.rel (0) target = $region85
    $region84: #{tpu_custom_call.1} parent=1 // pred_region
      %141 = dma.done [#allocation11], 896
    $region85: #{tpu_custom_call.1} parent=1 // pred_fallthru
      _
    %v142 = vld [vmem:[#allocation2] sm:$0xff]
    %v143 = vld [vmem:[%s2] sm:$0x1]
    %v144 = vld [vmem:[%s4] sm:$0x1]
    %v145 = vld [vmem:[%s6] sm:$0x1]
    %v146 = vld [vmem:[%s8] sm:$0x1]
    %v147 = vld [vmem:[%s10] sm:$0x1]
    %v148 = vld [vmem:[%s12] sm:$0x1]
    %v149 = vld [vmem:[%s14] sm:$0x1]
    %v150 = vld [vmem:[#allocation4] sm:$0xff]
    %v151 = vld [vmem:[#allocation4 + $0x8] sm:$0x1]
    %v153 = vperm.slane %v143, 0
    %vm155 = vcmask 72704
    %v157 = vsel %vm155, %v142, 0
    %vm159 = vcmask 1040384
    %v161 = vsel %vm159, %v151, 0
    %163 = vmatpush.msra.mxu0 0.0
    %164 = vmatpush.msra.mxu0 0.0
    %165 = vmatpush.msra.mxu0 0.0
    %166 = vmatpush.msra.mxu0 0.0
    %167 = vmatpush.msra.mxu0 0.0
    %168 = vmatpush.msra.mxu0 0.0
    %169 = vmatpush.msra.mxu0 0.0
    %170 = vmatpush.msra.mxu0 0.0
    %171 = vmatpush.msra.mxu0 0.0
    %172 = vmatpush.msra.mxu0 0.0
    %173 = vmatpush.msra.mxu0 0.0
    %174 = vmatpush.msra.mxu0 0.0
    %175 = vmatpush.msra.mxu0 0.0
    %176 = vmatpush.msra.mxu0 0.0
    %177 = vmatpush.msra.mxu0 %v161
    %178 = vmatpush.msra.mxu0 %v150
    %179 = vmatmul.f32.gmra.mxu0 %v157
    %v180 = vpop.f32.mrf.mxu0
    %v181 = vadd.f32 %v153, %v180
    %182 = vdwg.mxu0
    %v183 = vmax.f32 %v181, 0.0
    %v184 = vld [vmem:[%s3] sm:$0xff]
    %v185 = vld [vmem:[%s3 + $0x8] sm:$0xff]
    %v186 = vld [vmem:[%s3 + $0x10] sm:$0xff]
    %v187 = vld [vmem:[%s3 + $0x18] sm:$0xff]
    %v188 = vld [vmem:[%s3 + $0x20] sm:$0xff]
    %v189 = vld [vmem:[%s3 + $0x28] sm:$0xff]
    %v190 = vld [vmem:[%s3 + $0x30] sm:$0x3]
    %v192 = vperm.slane %v144, 0
    %vm194 = vcmask 408576
    %v196 = vsel %vm194, %v183, 0
    %vm198 = vcmask 1041408
    %v200 = vsel %vm198, %v190, 0
    %202 = vmatpush.msra.mxu0 0.0
    %203 = vmatpush.msra.mxu0 0.0
    %204 = vmatpush.msra.mxu0 0.0
    %205 = vmatpush.msra.mxu0 0.0
    %206 = vmatpush.msra.mxu0 0.0
    %207 = vmatpush.msra.mxu0 0.0
    %208 = vmatpush.msra.mxu0 0.0
    %209 = vmatpush.msra.mxu0 0.0
    %210 = vmatpush.msra.mxu0 0.0
    %211 = vmatpush.msra.mxu0 %v200
    %212 = vmatpush.msra.mxu0 %v189
    %213 = vmatpush.msra.mxu0 %v188
    %214 = vmatpush.msra.mxu0 %v187
    %215 = vmatpush.msra.mxu0 %v186
    %216 = vmatpush.msra.mxu0 %v185
    %217 = vmatpush.msra.mxu0 %v184
    %218 = vmatmul.f32.gmra.mxu0 %v196
    %v219 = vpop.f32.mrf.mxu0
    %v220 = vadd.f32 %v192, %v219
    %221 = vdwg.mxu0
    %v222 = vmax.f32 %v220, 0.0
    %v223 = vld [vmem:[#allocation6] sm:$0xff]
    %v224 = vld [vmem:[#allocation6 + $0x8] sm:$0xff]
    %v225 = vld [vmem:[#allocation6 + $0x10] sm:$0xff]
    %v226 = vld [vmem:[#allocation6 + $0x18] sm:$0xff]
    %v227 = vld [vmem:[#allocation6 + $0x20] sm:$0xff]
    %v228 = vld [vmem:[#allocation6 + $0x28] sm:$0xff]
    %v229 = vld [vmem:[#allocation6 + $0x30] sm:$0x3]
    %v231 = vperm.slane %v145, 0
    %v234 = vsel %vm194, %v222, 0
    %v237 = vsel %vm198, %v229, 0
    %239 = vmatpush.msra.mxu0 0.0
    %240 = vmatpush.msra.mxu0 0.0
    %241 = vmatpush.msra.mxu0 0.0
    %242 = vmatpush.msra.mxu0 0.0
    %243 = vmatpush.msra.mxu0 0.0
    %244 = vmatpush.msra.mxu0 0.0
    %245 = vmatpush.msra.mxu0 0.0
    %246 = vmatpush.msra.mxu0 0.0
    %247 = vmatpush.msra.mxu0 0.0
    %248 = vmatpush.msra.mxu0 %v237
    %249 = vmatpush.msra.mxu0 %v228
    %250 = vmatpush.msra.mxu0 %v227
    %251 = vmatpush.msra.mxu0 %v226
    %252 = vmatpush.msra.mxu0 %v225
    %253 = vmatpush.msra.mxu0 %v224
    %254 = vmatpush.msra.mxu0 %v223
    %255 = vmatmul.f32.gmra.mxu0 %v234
    %v256 = vpop.f32.mrf.mxu0
    %v257 = vadd.f32 %v231, %v256
    %258 = vdwg.mxu0
    %v259 = vmax.f32 %v257, 0.0
    %v260 = vld [vmem:[#allocation7] sm:$0xff]
    %v261 = vld [vmem:[#allocation7 + $0x8] sm:$0xff]
    %v262 = vld [vmem:[#allocation7 + $0x10] sm:$0xff]
    %v263 = vld [vmem:[#allocation7 + $0x18] sm:$0xff]
    %v264 = vld [vmem:[#allocation7 + $0x20] sm:$0xff]
    %v265 = vld [vmem:[#allocation7 + $0x28] sm:$0xff]
    %v266 = vld [vmem:[#allocation7 + $0x30] sm:$0x3]
    %v268 = vperm.slane %v146, 0
    %v271 = vsel %vm194, %v259, 0
    %v274 = vsel %vm198, %v266, 0
    %276 = vmatpush.msra.mxu0 0.0
    %277 = vmatpush.msra.mxu0 0.0
    %278 = vmatpush.msra.mxu0 0.0
    %279 = vmatpush.msra.mxu0 0.0
    %280 = vmatpush.msra.mxu0 0.0
    %281 = vmatpush.msra.mxu0 0.0
    %282 = vmatpush.msra.mxu0 0.0
    %283 = vmatpush.msra.mxu0 0.0
    %284 = vmatpush.msra.mxu0 0.0
    %285 = vmatpush.msra.mxu0 %v274
    %286 = vmatpush.msra.mxu0 %v265
    %287 = vmatpush.msra.mxu0 %v264
    %288 = vmatpush.msra.mxu0 %v263
    %289 = vmatpush.msra.mxu0 %v262
    %290 = vmatpush.msra.mxu0 %v261
    %291 = vmatpush.msra.mxu0 %v260
    %292 = vmatmul.f32.gmra.mxu0 %v271
    %v293 = vpop.f32.mrf.mxu0
    %v294 = vadd.f32 %v268, %v293
    %295 = vdwg.mxu0
    %v296 = vmax.f32 %v294, 0.0
    %v297 = vld [vmem:[#allocation9] sm:$0xff]
    %v298 = vld [vmem:[#allocation9 + $0x8] sm:$0xff]
    %v299 = vld [vmem:[#allocation9 + $0x10] sm:$0xff]
    %v300 = vld [vmem:[#allocation9 + $0x18] sm:$0xff]
    %v301 = vld [vmem:[#allocation9 + $0x20] sm:$0xff]
    %v302 = vld [vmem:[#allocation9 + $0x28] sm:$0xff]
    %v303 = vld [vmem:[#allocation9 + $0x30] sm:$0x3]
    %v305 = vperm.slane %v147, 0
    %v308 = vsel %vm194, %v296, 0
    %v311 = vsel %vm198, %v303, 0
    %313 = vmatpush.msra.mxu0 0.0
    %314 = vmatpush.msra.mxu0 0.0
    %315 = vmatpush.msra.mxu0 0.0
    %316 = vmatpush.msra.mxu0 0.0
    %317 = vmatpush.msra.mxu0 0.0
    %318 = vmatpush.msra.mxu0 0.0
    %319 = vmatpush.msra.mxu0 0.0
    %320 = vmatpush.msra.mxu0 0.0
    %321 = vmatpush.msra.mxu0 0.0
    %322 = vmatpush.msra.mxu0 %v311
    %323 = vmatpush.msra.mxu0 %v302
    %324 = vmatpush.msra.mxu0 %v301
    %325 = vmatpush.msra.mxu0 %v300
    %326 = vmatpush.msra.mxu0 %v299
    %327 = vmatpush.msra.mxu0 %v298
    %328 = vmatpush.msra.mxu0 %v297
    %329 = vmatmul.f32.gmra.mxu0 %v308
    %v330 = vpop.f32.mrf.mxu0
    %v331 = vadd.f32 %v305, %v330
    %332 = vdwg.mxu0
    %v333 = vmax.f32 %v331, 0.0
    %v334 = vld [vmem:[#allocation10] sm:$0xff]
    %v335 = vld [vmem:[#allocation10 + $0x8] sm:$0xff]
    %v336 = vld [vmem:[#allocation10 + $0x10] sm:$0xff]
    %v337 = vld [vmem:[#allocation10 + $0x18] sm:$0xff]
    %v338 = vld [vmem:[#allocation10 + $0x20] sm:$0xff]
    %v339 = vld [vmem:[#allocation10 + $0x28] sm:$0xff]
    %v340 = vld [vmem:[#allocation10 + $0x30] sm:$0x3]
    %v342 = vperm.slane %v148, 0
    %v345 = vsel %vm194, %v333, 0
    %v348 = vsel %vm198, %v340, 0
    %350 = vmatpush.msra.mxu0 0.0
    %351 = vmatpush.msra.mxu0 0.0
    %352 = vmatpush.msra.mxu0 0.0
    %353 = vmatpush.msra.mxu0 0.0
    %354 = vmatpush.msra.mxu0 0.0
    %355 = vmatpush.msra.mxu0 0.0
    %356 = vmatpush.msra.mxu0 0.0
    %357 = vmatpush.msra.mxu0 0.0
    %358 = vmatpush.msra.mxu0 0.0
    %359 = vmatpush.msra.mxu0 %v348
    %360 = vmatpush.msra.mxu0 %v339
    %361 = vmatpush.msra.mxu0 %v338
    %362 = vmatpush.msra.mxu0 %v337
    %363 = vmatpush.msra.mxu0 %v336
    %364 = vmatpush.msra.mxu0 %v335
    %365 = vmatpush.msra.mxu0 %v334
    %366 = vmatmul.f32.gmra.mxu0 %v345
    %v367 = vpop.f32.mrf.mxu0
    %v368 = vadd.f32 %v342, %v367
    %369 = vdwg.mxu0
    %v370 = vmax.f32 %v368, 0.0
    %v371 = vld [vmem:[%s13] sm:$0xff]
    %v372 = vld [vmem:[%s13 + $0x8] sm:$0xff]
    %v373 = vld [vmem:[%s13 + $0x10] sm:$0xff]
    %v374 = vld [vmem:[%s13 + $0x18] sm:$0xff]
    %v375 = vld [vmem:[%s13 + $0x20] sm:$0xff]
    %v376 = vld [vmem:[%s13 + $0x28] sm:$0xff]
    %v377 = vld [vmem:[%s13 + $0x30] sm:$0x3]
    %v379 = vperm.slane %v149, 0
    %v382 = vsel %vm194, %v370, 0
    %v385 = vsel %vm198, %v377, 0
    %387 = vmatpush.msra.mxu0 0.0
    %388 = vmatpush.msra.mxu0 0.0
    %389 = vmatpush.msra.mxu0 0.0
    %390 = vmatpush.msra.mxu0 0.0
    %391 = vmatpush.msra.mxu0 0.0
    %392 = vmatpush.msra.mxu0 0.0
    %393 = vmatpush.msra.mxu0 0.0
    %394 = vmatpush.msra.mxu0 0.0
    %395 = vmatpush.msra.mxu0 0.0
    %396 = vmatpush.msra.mxu0 %v385
    %397 = vmatpush.msra.mxu0 %v376
    %398 = vmatpush.msra.mxu0 %v375
    %399 = vmatpush.msra.mxu0 %v374
    %400 = vmatpush.msra.mxu0 %v373
    %401 = vmatpush.msra.mxu0 %v372
    %402 = vmatpush.msra.mxu0 %v371
    %403 = vmatmul.f32.gmra.mxu0 %v382
    %v404 = vpop.f32.mrf.mxu0
    %v405 = vadd.f32 %v379, %v404
    %406 = vdwg.mxu0
    %408 = vrot.lane.b32.xlu0 %v405, 127
    %v409 = vpop.permute.xlu0 %408
    %v411 = vsub.f32 %v405, %v409
    %v412 = vsub.f32 0.0, %v411
    %v413 = vmul.f32 %v412, 1.442695
    %v414 = vpow.pop %v413
    %v415 = vadd.f32 %v414, 1.0
    %v416 = vrcp.pop %v415
    %v417 = vmul.f32 %v415, %v416
    %v418 = vsub.f32 1.0, %v417
    %v419 = vmul.f32 %v416, %v418
    %v420 = vadd.f32 %v416, %v419
    %vm421 = vweird.f32 %v415
    %vm422 = vweird.f32 %v416
    %vm423 = vmor %vm421, %vm422
    %v424 = vsel %vm423, %v416, %v420
    %v425 = vand.u32 2147483647, %v415
    %vm426 = vcmp.eq.f32.partialorder %v425, 8.507059e+37
    %v427 = vand.u32 %v415, 2147483648
    %v428 = vor.u32 1.1754944e-38, %v427
    %v429 = vsel %vm426, %v428, %v424
    %v430 = vmul.f32 1.0, %v429
    %v431 = vsub.f32 1.0, %v430
    %433 = vrot.lane.b32.xlu0 %v431, 1
    %v434 = vpop.permute.xlu0 %433
    %vm436 = vcmask 7168
    %v437 = vsel %vm436, %v430, %v434
    %vm438 = vcmask 15360
    %439 = vst.msk [vmem:[%s15] sm:$0xff] %vm438, %v437
    // Predicated region
    $region86: #{tpu_custom_call.1} parent=1 // pred_check
      _
    $region87: #{tpu_custom_call.1} parent=1 // pred_check_branch
      %441 = sbr.rel (0) target = $region89
    $region88: #{tpu_custom_call.1} parent=1 // pred_region
      _
    $region89: #{tpu_custom_call.1} parent=1 // pred_fallthru
      _
    // Predicated region
    $region90: #{tpu_custom_call.1} parent=1 // pred_check
      _
    $region91: #{tpu_custom_call.1} parent=1 // pred_check_branch
      %443 = sbr.rel (0) target = $region93
    $region92: #{tpu_custom_call.1} parent=1 // pred_region
      _
    $region93: #{tpu_custom_call.1} parent=1 // pred_fallthru
      _
    %444 = vsyncpa [#allocation3], 1
    %445 = vsyncpa [#allocation5], 1
    %446 = vsyncpa [#allocation8], 1
    %447 = vsyncpa [#allocation11], 1

</llo_original>
